<compile_context>
chip_gen: v6e
topology: v6e:2x2x1
jax: 0.10.0
libtpu: 0.0.40
codegen_flags: <defaults>
</compile_context>

<pallas_src>
import math
import functools

import numpy as np
import jax
import jax.numpy as jnp
from jax import lax
from jax.experimental import pallas as pl
from jax.experimental.pallas import tpu as pltpu  # noqa: F401

# ---- model hyper-parameters (small, consistent with the module) -------------
D_MODEL = 32
NUM_HEADS = 4
D_K = D_MODEL // NUM_HEADS
D_FF = 64
SEQ_LEN = 8
BATCH = 2
EPS = 1e-6
MASK_VALUE = -1.0e9          # module: masked_fill(mask == 0, -1e9)

SLAB_LANES = max(D_MODEL, D_FF, NUM_HEADS * BATCH * SEQ_LEN)   # 64


def _round8(r):
    return ((r + 7) // 8) * 8


def make_layout(batch, seq_len):
    """Row offsets for the single packed parameter/constant slab."""
    n = batch * seq_len               # 16 tokens
    s = NUM_HEADS * n                 # 64 (head, key) columns
    entries = [
        ("wq", (D_MODEL, D_MODEL)), ("wk", (D_MODEL, D_MODEL)),
        ("wv", (D_MODEL, D_MODEL)), ("w0", (D_MODEL, D_MODEL)),
        ("w1", (D_MODEL, D_FF)),    ("w2", (D_FF, D_MODEL)),
        ("vbd", (s, D_MODEL)),      # head-block-diagonal 0/1 mask for K_bd / V_bd
        ("sum_bd", (s, s)),         # block-ones matrix: per-head softmax denominators
        ("bias", (n, s)),           # constant same-batch additive attention bias
        ("g1", (1, D_MODEL)), ("be1", (1, D_MODEL)),
        ("g2", (1, D_MODEL)), ("be2", (1, D_MODEL)),
        ("bq", (1, D_MODEL)), ("bk", (1, D_MODEL)), ("bv", (1, D_MODEL)),
        ("b0", (1, D_MODEL)),
        ("bf1", (1, D_FF)), ("bf2", (1, D_MODEL)),
    ]
    layout, row = {}, 0
    for name, shape in entries:
        layout[name] = (row, shape)
        row = _round8(row + shape[0])     # every entry starts 8-sublane aligned
    return layout, row


def prepare_params(p, batch, seq_len):
    """One-time packing of all weights + attention constants into one slab."""
    n = batch * seq_len
    s = NUM_HEADS * n
    scale = 1.0 / math.sqrt(D_K)
    layout, rows = make_layout(batch, seq_len)
    slab = np.zeros((rows, SLAB_LANES), np.float32)

    def put(name, arr):
        r0, (h, w) = layout[name]
        slab[r0:r0 + h, :w] = np.asarray(arr, np.float32).reshape(h, w)

    put("wq", np.asarray(p["wq"]) * scale)     # fold 1/sqrt(d_k) into Q projection
    put("bq", np.asarray(p["bq"]) * scale)
    for name in ("wk", "wv", "w0", "w1", "w2", "g1", "be1", "g2", "be2",
                 "bk", "bv", "b0", "bf1", "bf2"):
        put(name, p[name])

    # head-block-diagonal mask: row r belongs to head h = r // n and keeps only
    # the feature lanes of head h (c // d_k == h).
    r = np.arange(s)[:, None]
    c = np.arange(D_MODEL)[None, :]
    put("vbd", ((r // n) == (c // D_K)).astype(np.float32))

    # block-ones matrix: column j sums over all keys of the same head block.
    a = np.arange(s)
    put("sum_bd", ((a[:, None] // n) == (a[None, :] // n)).astype(np.float32))

    # constant part of the attention bias: -1e9 where query batch != key batch.
    qb = np.arange(n)[:, None] // seq_len
    kb = (np.arange(s)[None, :] % n) // seq_len
    put("bias", np.where(qb == kb, 0.0, MASK_VALUE).astype(np.float32))

    return jnp.asarray(slab), layout


def _layer_norm(v, gamma, beta):
    # PyTorch LayerNorm over last dim, biased variance, eps inside rsqrt
    mu = jnp.mean(v, axis=-1, keepdims=True)
    var = jnp.mean((v - mu) ** 2, axis=-1, keepdims=True)
    return (v - mu) * lax.rsqrt(var + EPS) * gamma + beta


def encoder_layer_kernel(x_ref, mask_ref, slab_ref, out_ref, *, layout, num_heads):
    def param(name):
        r0, (h, w) = layout[name]
        return slab_ref[r0:r0 + h, 0:w]        # aligned static slice of the slab

    x = x_ref[...]                             # (n, D) f32

    # additive attention bias: packed same-batch constant + runtime key padding.
    keep = mask_ref[...] != 0                                  # (1, H*n)
    bias = param("bias") + jnp.where(keep, 0.0, MASK_VALUE)    # (n, H*n)

    # ---- sub-layer 1: pre-LN multi-head self-attention ----------------------
    x1 = _layer_norm(x, param("g1"), param("be1"))

    q = jnp.dot(x1, param("wq"), preferred_element_type=jnp.float32) + param("bq")
    k = jnp.dot(x1, param("wk"), preferred_element_type=jnp.float32) + param("bk")
    v = jnp.dot(x1, param("wv"), preferred_element_type=jnp.float32) + param("bv")

    # Head-block-diagonal K / V: replicate along sublanes (cheap) and zero out
    # the other heads' feature lanes, so all heads run in single MXU ops.
    vbd = param("vbd")                                         # (H*n, D) 0/1
    k_bd = jnp.concatenate([k] * num_heads, axis=0) * vbd      # (H*n, D)
    v_bd = jnp.concatenate([v] * num_heads, axis=0) * vbd      # (H*n, D)

    # scores[i, h*n + j] = q_h[i] . k_h[j]   (1/sqrt(d_k) already folded into wq)
    scores = lax.dot_general(q, k_bd, (((1,), (1,)), ((), ())),
                             preferred_element_type=jnp.float32) + bias  # (n, H*n)
    m = jnp.max(scores, axis=-1, keepdims=True)    # shared stabilizer (softmax-invariant)
    e = jnp.exp(scores - m)
    denom = jnp.dot(e, param("sum_bd"), preferred_element_type=jnp.float32)
    p = e / denom                                  # exact per-head softmax

    # heads land already lane-concatenated: o[:, h*d_k:(h+1)*d_k] = P_h @ v_h
    o = jnp.dot(p, v_bd, preferred_element_type=jnp.float32)              # (n, D)
    attn = jnp.dot(o, param("w0"), preferred_element_type=jnp.float32) + param("b0")
    x = x + attn                                   # dropout = identity (inference)

    # ---- sub-layer 2: pre-LN feed-forward ------------------------------------
    x2 = _layer_norm(x, param("g2"), param("be2"))
    h1 = jnp.maximum(
        jnp.dot(x2, param("w1"), preferred_element_type=jnp.float32) + param("bf1"),
        0.0)                                                               # ReLU
    ff = jnp.dot(h1, param("w2"), preferred_element_type=jnp.float32) + param("bf2")

    out_ref[...] = (x + ff).astype(out_ref.dtype)


def encoder_layer(x, e_mask, slab, layout):
    """x: (B, L, D) float32, e_mask: (B, 1, L) (nonzero = keep), slab: packed params."""
    B, L, D = x.shape
    n = B * L
    x2d = x.reshape(n, D)                                          # fold batch into sublanes
    # key-padding mask replicated per head -> column r of scores uses key r % n
    mask = jnp.tile(e_mask.reshape(1, n).astype(jnp.int32), (1, NUM_HEADS))

    kernel = functools.partial(encoder_layer_kernel, layout=layout, num_heads=NUM_HEADS)

    out2d = pl.pallas_call(
        kernel,
        out_shape=jax.ShapeDtypeStruct((n, D), x.dtype),
        # No grid / BlockSpecs: whole problem (<250 KB resident) in one
        # invocation; 3 input DMAs + 1 output DMA total.
    )(x2d, mask, slab)

    return out2d.reshape(B, L, D)


# --------------------- pure-JAX reference (for correctness) ------------------
def encoder_layer_ref(x, e_mask, p):
    def ln(v, g, b):
        mu = jnp.mean(v, axis=-1, keepdims=True)
        var = jnp.mean((v - mu) ** 2, axis=-1, keepdims=True)
        return (v - mu) / jnp.sqrt(var + EPS) * g + b

    B, L, D = x.shape
    x1 = ln(x, p["g1"], p["be1"])
    q = x1 @ p["wq"] + p["bq"]
    k = x1 @ p["wk"] + p["bk"]
    v = x1 @ p["wv"] + p["bv"]

    def split(t):  # (B, L, D) -> (B, H, L, dk)
        return t.reshape(B, L, NUM_HEADS, D_K).transpose(0, 2, 1, 3)

    qh, kh, vh = split(q), split(k), split(v)
    scores = jnp.einsum("bhqd,bhkd->bhqk", qh, kh) / math.sqrt(D_K)
    mask = e_mask[:, None, :, :]  # (B,1,1,L)
    scores = jnp.where(mask == 0, MASK_VALUE, scores)
    probs = jax.nn.softmax(scores, axis=-1)
    attn = jnp.einsum("bhqk,bhkd->bhqd", probs, vh)
    attn = attn.transpose(0, 2, 1, 3).reshape(B, L, D)
    attn = attn @ p["w0"] + p["b0"]
    x = x + attn
    x2 = ln(x, p["g2"], p["be2"])
    ff = jnp.maximum(x2 @ p["w1"] + p["bf1"], 0.0) @ p["w2"] + p["bf2"]
    return x + ff


def make_params(key):
    ks = jax.random.split(key, 8)
    n = lambda k, shape: (0.02 * jax.random.normal(k, shape)).astype(jnp.float32)
    return {
        "g1": jnp.ones((1, D_MODEL), jnp.float32),
        "be1": jnp.zeros((1, D_MODEL), jnp.float32),
        "wq": n(ks[0], (D_MODEL, D_MODEL)), "bq": n(ks[1], (1, D_MODEL)),
        "wk": n(ks[2], (D_MODEL, D_MODEL)), "bk": jnp.zeros((1, D_MODEL), jnp.float32),
        "wv": n(ks[3], (D_MODEL, D_MODEL)), "bv": jnp.zeros((1, D_MODEL), jnp.float32),
        "w0": n(ks[4], (D_MODEL, D_MODEL)), "b0": jnp.zeros((1, D_MODEL), jnp.float32),
        "g2": jnp.ones((1, D_MODEL), jnp.float32),
        "be2": jnp.zeros((1, D_MODEL), jnp.float32),
        "w1": n(ks[5], (D_MODEL, D_FF)), "bf1": n(ks[6], (1, D_FF)),
        "w2": n(ks[7], (D_FF, D_MODEL)), "bf2": jnp.zeros((1, D_MODEL), jnp.float32),
    }


if __name__ == "__main__":
    key = jax.random.PRNGKey(0)
    kx, kp = jax.random.split(key)

    x = jax.random.normal(kx, (BATCH, SEQ_LEN, D_MODEL), dtype=jnp.float32)
    # padding mask: last 2 positions of batch 1 are padding
    e_mask = jnp.ones((BATCH, 1, SEQ_LEN), dtype=jnp.int32)
    e_mask = e_mask.at[1, 0, -2:].set(0)

    params = make_params(kp)
    slab, layout = prepare_params(params, BATCH, SEQ_LEN)   # one-time packing, off hot path

    out = encoder_layer(x, e_mask, slab, layout)
    out = jax.block_until_ready(out)

    ref = encoder_layer_ref(x, e_mask, params)
    assert out.shape == (BATCH, SEQ_LEN, D_MODEL)
    assert jnp.allclose(out, ref, atol=2e-4, rtol=2e-4), "mismatch vs reference"

    print("KERNEL_OK")
</pallas_src>

<mosaic_0001>
module attributes {stable_mosaic.version = 11 : i64} {
  func.func @encoder_layer_kernel(%arg0: memref<16x32xf32, #tpu.memory_space<vmem>>, %arg1: memref<1x64xi32, #tpu.memory_space<vmem>>, %arg2: memref<448x64xf32, #tpu.memory_space<vmem>>, %arg3: memref<16x32xf32, #tpu.memory_space<vmem>>) attributes {dimension_semantics = [], scalar_prefetch = 0 : i64, scratch_operands = 0 : i64, tpu.core_type = #tpu.core_type<tc>} {
    %c0 = arith.constant 0 : index
    %c0_0 = arith.constant 0 : index
    %0 = vector.load %arg0[%c0, %c0_0] : memref<16x32xf32, #tpu.memory_space<vmem>>, vector<16x32xf32>
    %c0_1 = arith.constant 0 : index
    %c0_2 = arith.constant 0 : index
    %1 = vector.load %arg1[%c0_1, %c0_2] : memref<1x64xi32, #tpu.memory_space<vmem>>, vector<1x64xi32>
    %c0_i32 = arith.constant 0 : i32
    %2 = vector.broadcast %c0_i32 : i32 to vector<1x64xi32>
    %3 = arith.cmpi ne, %1, %2 : vector<1x64xi32>
    %c352 = arith.constant 352 : index
    %c0_3 = arith.constant 0 : index
    %4 = vector.load %arg2[%c352, %c0_3] : memref<448x64xf32, #tpu.memory_space<vmem>>, vector<16x64xf32>
    %cst = arith.constant 0.000000e+00 : f32
    %cst_4 = arith.constant -1.000000e+09 : f32
    %5 = vector.broadcast %cst : f32 to vector<1x64xf32>
    %6 = vector.broadcast %cst_4 : f32 to vector<1x64xf32>
    %7 = arith.select %3, %5, %6 : vector<1x64xi1>, vector<1x64xf32>
    %8 = vector.broadcast %7 : vector<1x64xf32> to vector<16x64xf32>
    %9 = arith.addf %4, %8 : vector<16x64xf32>
    %c368 = arith.constant 368 : index
    %c0_5 = arith.constant 0 : index
    %10 = vector.load %arg2[%c368, %c0_5] : memref<448x64xf32, #tpu.memory_space<vmem>>, vector<1x32xf32>
    %c376 = arith.constant 376 : index
    %c0_6 = arith.constant 0 : index
    %11 = vector.load %arg2[%c376, %c0_6] : memref<448x64xf32, #tpu.memory_space<vmem>>, vector<1x32xf32>
    %cst_7 = arith.constant dense<0.000000e+00> : vector<16xf32>
    %12 = vector.multi_reduction <add>, %0, %cst_7 [1] : vector<16x32xf32> to vector<16xf32>
    %13 = vector.shape_cast %12 : vector<16xf32> to vector<16x1xf32>
    %cst_8 = arith.constant 3.200000e+01 : f32
    %14 = vector.broadcast %cst_8 : f32 to vector<16x1xf32>
    %15 = arith.divf %13, %14 : vector<16x1xf32>
    %16 = vector.broadcast %15 : vector<16x1xf32> to vector<16x32xf32>
    %17 = arith.subf %0, %16 : vector<16x32xf32>
    %18 = arith.mulf %17, %17 : vector<16x32xf32>
    %cst_9 = arith.constant dense<0.000000e+00> : vector<16xf32>
    %19 = vector.multi_reduction <add>, %18, %cst_9 [1] : vector<16x32xf32> to vector<16xf32>
    %20 = vector.shape_cast %19 : vector<16xf32> to vector<16x1xf32>
    %cst_10 = arith.constant 3.200000e+01 : f32
    %21 = vector.broadcast %cst_10 : f32 to vector<16x1xf32>
    %22 = arith.divf %20, %21 : vector<16x1xf32>
    %23 = vector.broadcast %15 : vector<16x1xf32> to vector<16x32xf32>
    %24 = arith.subf %0, %23 : vector<16x32xf32>
    %cst_11 = arith.constant 9.99999997E-7 : f32
    %25 = vector.broadcast %cst_11 : f32 to vector<16x1xf32>
    %26 = arith.addf %22, %25 : vector<16x1xf32>
    %27 = math.rsqrt %26 : vector<16x1xf32>
    %28 = vector.broadcast %27 : vector<16x1xf32> to vector<16x32xf32>
    %29 = arith.mulf %24, %28 : vector<16x32xf32>
    %30 = vector.broadcast %10 : vector<1x32xf32> to vector<16x32xf32>
    %31 = arith.mulf %29, %30 : vector<16x32xf32>
    %32 = vector.broadcast %11 : vector<1x32xf32> to vector<16x32xf32>
    %33 = arith.addf %31, %32 : vector<16x32xf32>
    %c0_12 = arith.constant 0 : index
    %c0_13 = arith.constant 0 : index
    %34 = vector.load %arg2[%c0_12, %c0_13] : memref<448x64xf32, #tpu.memory_space<vmem>>, vector<32x32xf32>
    %cst_14 = arith.constant dense<0.000000e+00> : vector<16x32xf32>
    %35 = tpu.matmul %33, %34, %cst_14 {dimension_numbers = #tpu.dot_dimension_numbers<[1], [0], [0], [1], [0, 0, 1, 1], [], []>} : vector<16x32xf32>, vector<32x32xf32>, vector<16x32xf32> -> vector<16x32xf32>
    %c400 = arith.constant 400 : index
    %c0_15 = arith.constant 0 : index
    %36 = vector.load %arg2[%c400, %c0_15] : memref<448x64xf32, #tpu.memory_space<vmem>>, vector<1x32xf32>
    %37 = vector.broadcast %36 : vector<1x32xf32> to vector<16x32xf32>
    %38 = arith.addf %35, %37 : vector<16x32xf32>
    %c32 = arith.constant 32 : index
    %c0_16 = arith.constant 0 : index
    %39 = vector.load %arg2[%c32, %c0_16] : memref<448x64xf32, #tpu.memory_space<vmem>>, vector<32x32xf32>
    %cst_17 = arith.constant dense<0.000000e+00> : vector<16x32xf32>
    %40 = tpu.matmul %33, %39, %cst_17 {dimension_numbers = #tpu.dot_dimension_numbers<[1], [0], [0], [1], [0, 0, 1, 1], [], []>} : vector<16x32xf32>, vector<32x32xf32>, vector<16x32xf32> -> vector<16x32xf32>
    %c408 = arith.constant 408 : index
    %c0_18 = arith.constant 0 : index
    %41 = vector.load %arg2[%c408, %c0_18] : memref<448x64xf32, #tpu.memory_space<vmem>>, vector<1x32xf32>
    %42 = vector.broadcast %41 : vector<1x32xf32> to vector<16x32xf32>
    %43 = arith.addf %40, %42 : vector<16x32xf32>
    %c64 = arith.constant 64 : index
    %c0_19 = arith.constant 0 : index
    %44 = vector.load %arg2[%c64, %c0_19] : memref<448x64xf32, #tpu.memory_space<vmem>>, vector<32x32xf32>
    %cst_20 = arith.constant dense<0.000000e+00> : vector<16x32xf32>
    %45 = tpu.matmul %33, %44, %cst_20 {dimension_numbers = #tpu.dot_dimension_numbers<[1], [0], [0], [1], [0, 0, 1, 1], [], []>} : vector<16x32xf32>, vector<32x32xf32>, vector<16x32xf32> -> vector<16x32xf32>
    %c416 = arith.constant 416 : index
    %c0_21 = arith.constant 0 : index
    %46 = vector.load %arg2[%c416, %c0_21] : memref<448x64xf32, #tpu.memory_space<vmem>>, vector<1x32xf32>
    %47 = vector.broadcast %46 : vector<1x32xf32> to vector<16x32xf32>
    %48 = arith.addf %45, %47 : vector<16x32xf32>
    %c224 = arith.constant 224 : index
    %c0_22 = arith.constant 0 : index
    %49 = vector.load %arg2[%c224, %c0_22] : memref<448x64xf32, #tpu.memory_space<vmem>>, vector<64x32xf32>
    %50 = tpu.concatenate %43, %43, %43, %43 in 0 : vector<16x32xf32>, vector<16x32xf32>, vector<16x32xf32>, vector<16x32xf32> -> vector<64x32xf32>
    %51 = arith.mulf %50, %49 : vector<64x32xf32>
    %52 = tpu.concatenate %48, %48, %48, %48 in 0 : vector<16x32xf32>, vector<16x32xf32>, vector<16x32xf32>, vector<16x32xf32> -> vector<64x32xf32>
    %53 = arith.mulf %52, %49 : vector<64x32xf32>
    %cst_23 = arith.constant dense<0.000000e+00> : vector<16x64xf32>
    %54 = tpu.matmul %38, %51, %cst_23 {dimension_numbers = #tpu.dot_dimension_numbers<[1], [1], [0], [0], [0, 0, 1, 0], [], []>} : vector<16x32xf32>, vector<64x32xf32>, vector<16x64xf32> -> vector<16x64xf32>
    %55 = arith.addf %54, %9 : vector<16x64xf32>
    %cst_24 = arith.constant dense<0xFF800000> : vector<16xf32>
    %56 = vector.multi_reduction <maximumf>, %55, %cst_24 [1] : vector<16x64xf32> to vector<16xf32>
    %57 = vector.shape_cast %56 : vector<16xf32> to vector<16x1xf32>
    %58 = vector.broadcast %57 : vector<16x1xf32> to vector<16x64xf32>
    %59 = arith.subf %55, %58 : vector<16x64xf32>
    %60 = math.exp %59 : vector<16x64xf32>
    %c288 = arith.constant 288 : index
    %c0_25 = arith.constant 0 : index
    %61 = vector.load %arg2[%c288, %c0_25] : memref<448x64xf32, #tpu.memory_space<vmem>>, vector<64x64xf32>
    %cst_26 = arith.constant dense<0.000000e+00> : vector<16x64xf32>
    %62 = tpu.matmul %60, %61, %cst_26 {dimension_numbers = #tpu.dot_dimension_numbers<[1], [0], [0], [1], [0, 0, 1, 1], [], []>} : vector<16x64xf32>, vector<64x64xf32>, vector<16x64xf32> -> vector<16x64xf32>
    %63 = arith.divf %60, %62 : vector<16x64xf32>
    %cst_27 = arith.constant dense<0.000000e+00> : vector<16x32xf32>
    %64 = tpu.matmul %63, %53, %cst_27 {dimension_numbers = #tpu.dot_dimension_numbers<[1], [0], [0], [1], [0, 0, 1, 1], [], []>} : vector<16x64xf32>, vector<64x32xf32>, vector<16x32xf32> -> vector<16x32xf32>
    %c96 = arith.constant 96 : index
    %c0_28 = arith.constant 0 : index
    %65 = vector.load %arg2[%c96, %c0_28] : memref<448x64xf32, #tpu.memory_space<vmem>>, vector<32x32xf32>
    %cst_29 = arith.constant dense<0.000000e+00> : vector<16x32xf32>
    %66 = tpu.matmul %64, %65, %cst_29 {dimension_numbers = #tpu.dot_dimension_numbers<[1], [0], [0], [1], [0, 0, 1, 1], [], []>} : vector<16x32xf32>, vector<32x32xf32>, vector<16x32xf32> -> vector<16x32xf32>
    %c424 = arith.constant 424 : index
    %c0_30 = arith.constant 0 : index
    %67 = vector.load %arg2[%c424, %c0_30] : memref<448x64xf32, #tpu.memory_space<vmem>>, vector<1x32xf32>
    %68 = vector.broadcast %67 : vector<1x32xf32> to vector<16x32xf32>
    %69 = arith.addf %66, %68 : vector<16x32xf32>
    %70 = arith.addf %0, %69 : vector<16x32xf32>
    %c384 = arith.constant 384 : index
    %c0_31 = arith.constant 0 : index
    %71 = vector.load %arg2[%c384, %c0_31] : memref<448x64xf32, #tpu.memory_space<vmem>>, vector<1x32xf32>
    %c392 = arith.constant 392 : index
    %c0_32 = arith.constant 0 : index
    %72 = vector.load %arg2[%c392, %c0_32] : memref<448x64xf32, #tpu.memory_space<vmem>>, vector<1x32xf32>
    %cst_33 = arith.constant dense<0.000000e+00> : vector<16xf32>
    %73 = vector.multi_reduction <add>, %70, %cst_33 [1] : vector<16x32xf32> to vector<16xf32>
    %74 = vector.shape_cast %73 : vector<16xf32> to vector<16x1xf32>
    %cst_34 = arith.constant 3.200000e+01 : f32
    %75 = vector.broadcast %cst_34 : f32 to vector<16x1xf32>
    %76 = arith.divf %74, %75 : vector<16x1xf32>
    %77 = vector.broadcast %76 : vector<16x1xf32> to vector<16x32xf32>
    %78 = arith.subf %70, %77 : vector<16x32xf32>
    %79 = arith.mulf %78, %78 : vector<16x32xf32>
    %cst_35 = arith.constant dense<0.000000e+00> : vector<16xf32>
    %80 = vector.multi_reduction <add>, %79, %cst_35 [1] : vector<16x32xf32> to vector<16xf32>
    %81 = vector.shape_cast %80 : vector<16xf32> to vector<16x1xf32>
    %cst_36 = arith.constant 3.200000e+01 : f32
    %82 = vector.broadcast %cst_36 : f32 to vector<16x1xf32>
    %83 = arith.divf %81, %82 : vector<16x1xf32>
    %84 = vector.broadcast %76 : vector<16x1xf32> to vector<16x32xf32>
    %85 = arith.subf %70, %84 : vector<16x32xf32>
    %cst_37 = arith.constant 9.99999997E-7 : f32
    %86 = vector.broadcast %cst_37 : f32 to vector<16x1xf32>
    %87 = arith.addf %83, %86 : vector<16x1xf32>
    %88 = math.rsqrt %87 : vector<16x1xf32>
    %89 = vector.broadcast %88 : vector<16x1xf32> to vector<16x32xf32>
    %90 = arith.mulf %85, %89 : vector<16x32xf32>
    %91 = vector.broadcast %71 : vector<1x32xf32> to vector<16x32xf32>
    %92 = arith.mulf %90, %91 : vector<16x32xf32>
    %93 = vector.broadcast %72 : vector<1x32xf32> to vector<16x32xf32>
    %94 = arith.addf %92, %93 : vector<16x32xf32>
    %c128 = arith.constant 128 : index
    %c0_38 = arith.constant 0 : index
    %95 = vector.load %arg2[%c128, %c0_38] : memref<448x64xf32, #tpu.memory_space<vmem>>, vector<32x64xf32>
    %cst_39 = arith.constant dense<0.000000e+00> : vector<16x64xf32>
    %96 = tpu.matmul %94, %95, %cst_39 {dimension_numbers = #tpu.dot_dimension_numbers<[1], [0], [0], [1], [0, 0, 1, 1], [], []>} : vector<16x32xf32>, vector<32x64xf32>, vector<16x64xf32> -> vector<16x64xf32>
    %c432 = arith.constant 432 : index
    %c0_40 = arith.constant 0 : index
    %97 = vector.load %arg2[%c432, %c0_40] : memref<448x64xf32, #tpu.memory_space<vmem>>, vector<1x64xf32>
    %98 = vector.broadcast %97 : vector<1x64xf32> to vector<16x64xf32>
    %99 = arith.addf %96, %98 : vector<16x64xf32>
    %cst_41 = arith.constant 0.000000e+00 : f32
    %100 = vector.broadcast %cst_41 : f32 to vector<16x64xf32>
    %101 = arith.maximumf %99, %100 : vector<16x64xf32>
    %c160 = arith.constant 160 : index
    %c0_42 = arith.constant 0 : index
    %102 = vector.load %arg2[%c160, %c0_42] : memref<448x64xf32, #tpu.memory_space<vmem>>, vector<64x32xf32>
    %cst_43 = arith.constant dense<0.000000e+00> : vector<16x32xf32>
    %103 = tpu.matmul %101, %102, %cst_43 {dimension_numbers = #tpu.dot_dimension_numbers<[1], [0], [0], [1], [0, 0, 1, 1], [], []>} : vector<16x64xf32>, vector<64x32xf32>, vector<16x32xf32> -> vector<16x32xf32>
    %c440 = arith.constant 440 : index
    %c0_44 = arith.constant 0 : index
    %104 = vector.load %arg2[%c440, %c0_44] : memref<448x64xf32, #tpu.memory_space<vmem>>, vector<1x32xf32>
    %105 = vector.broadcast %104 : vector<1x32xf32> to vector<16x32xf32>
    %106 = arith.addf %103, %105 : vector<16x32xf32>
    %107 = arith.addf %70, %106 : vector<16x32xf32>
    %c0_45 = arith.constant 0 : index
    %c0_46 = arith.constant 0 : index
    %108 = vector.load %arg3[%c0_45, %c0_46] : memref<16x32xf32, #tpu.memory_space<vmem>>, vector<16x32xf32>
    tpu.vector_store %arg3[%c0_45, %c0_46], %107 {strides = array<i32>} : memref<16x32xf32, #tpu.memory_space<vmem>>, vector<16x32xf32>,
    return
  }
}

</mosaic_0001>

<llo_original>
// kernel: tpu_custom_call.1
$region0: #{tpu_custom_call.1}
  #allocation0 [shape = 'u32[]', space=smem, size = 0x4, offset = 0x4, fixed_abs, tag = 'smem constant byte address 0x4 - core index']
  #allocation1 [shape = 'u32[144,128]{1,0:T(1,128)}', space=vmem, size = 0x12000, scoped, tag = 'internal scratch']
  %s0 = inlined_call_operand.vmem [shape: f32[16,32], index: 0, kind: input, shape index: {}]
  %s1 = inlined_call_operand.vmem [shape: s32[1,64], index: 1, kind: input, shape index: {}]
  %s2 = inlined_call_operand.vmem [shape: f32[448,64], index: 2, kind: input, shape index: {}]
  %s3 = inlined_call_operand.hbm [shape: f32[16,32], index: 3, kind: output, shape index: {}]
  %s4 = sld [smem:[#allocation0]]
  $region22: #{tpu_custom_call.1} parent=0
    _
  %s6 = ssub.s32 1, %s4
  %s7 = scalar_select 0, %s6, %s4
  $region1: #{tpu_custom_call.1} parent=0
    #allocation2 [shape = 'u8[8192]{0}', space=vmem, size = 0x2000, scoped, tag = 'output window, operand 0, single buffered']
    #allocation3 [shape = 's32[1]{0}', space=sflag, size = 0x4, scoped, tag = 'scoped memory for tpu_custom_call.1']
    %8 = vsyncpa [#allocation3], 0
    // Predicated region
    $region2: #{tpu_custom_call.1} parent=1 // pred_check
      _
    $region3: #{tpu_custom_call.1} parent=1 // pred_check_branch
      %10 = sbr.rel (0) target = $region5
    $region4: #{tpu_custom_call.1} parent=1 // pred_region
      _
    $region5: #{tpu_custom_call.1} parent=1 // pred_fallthru
      _
    // Predicated region
    $region6: #{tpu_custom_call.1} parent=1 // pred_check
      _
    $region7: #{tpu_custom_call.1} parent=1 // pred_check_branch
      %12 = sbr.rel (0) target = $region9
    $region8: #{tpu_custom_call.1} parent=1 // pred_region
      _
    $region9: #{tpu_custom_call.1} parent=1 // pred_fallthru
      _
    // Predicated region
    $region10: #{tpu_custom_call.1} parent=1 // pred_check
      _
    $region11: #{tpu_custom_call.1} parent=1 // pred_check_branch
      %14 = sbr.rel (0) target = $region13
    $region12: #{tpu_custom_call.1} parent=1 // pred_region
      _
    $region13: #{tpu_custom_call.1} parent=1 // pred_fallthru
      _
    %v15 = vld [vmem:[%s0] sm:$0xff]
    %v16 = vld [vmem:[%s0 + $0x8] sm:$0xff]
    %v17 = vld [vmem:[%s1] sm:$0x1]
    %vm18 = vcmp.ne.s32.totalorder %v17, 0
    %v19 = vld [vmem:[%s2 + $0x160] sm:$0xff]
    %v20 = vld [vmem:[%s2 + $0x168] sm:$0xff]
    %v21 = vsel %vm18, 0.0, -1e+09
    %v23 = vlaneseq
    %v24 = vshrl.u32 %v23, 7
    %v25 = vsub.s32 0, %v24
    %v26 = vrot.slane %v21, %v25
    %v28 = vadd.f32 %v19, %v26
    %v29 = vadd.f32 %v20, %v26
    %v30 = vld [vmem:[%s2 + $0x170] sm:$0x1]
    %v31 = vld [vmem:[%s2 + $0x178] sm:$0x1]
    %vm32 = vcmask 261120
    %v33 = vsel %vm32, %v15, 0.0
    %34 = vadd.xlane.f32.xlu0 %v33
    %v35 = vpop.xlane.xlu0 %34
    %v36 = vsel %vm32, %v16, 0.0
    %37 = vadd.xlane.f32.xlu0 %v36
    %v38 = vpop.xlane.xlu0 %37
    %v39 = vrcp.pop 32.0
    %v40 = vmul.f32 %v35, %v39
    %v41 = vmul.f32 %v38, %v39
    %v42 = vsub.f32 %v15, %v40
    %v43 = vsub.f32 %v16, %v41
    %v44 = vmul.f32 %v42, %v42
    %v45 = vmul.f32 %v43, %v43
    %v46 = vsel %vm32, %v44, 0.0
    %47 = vadd.xlane.f32.xlu0 %v46
    %v48 = vpop.xlane.xlu0 %47
    %v49 = vsel %vm32, %v45, 0.0
    %50 = vadd.xlane.f32.xlu0 %v49
    %v51 = vpop.xlane.xlu0 %50
    %v52 = vmul.f32 %v48, %v39
    %v53 = vmul.f32 %v51, %v39
    %v54 = vadd.f32 %v52, 1e-06
    %v55 = vadd.f32 %v53, 1e-06
    %v56 = vrsqrt.pop %v54
    %v57 = vrsqrt.pop %v55
    %v58 = vmul.f32 %v42, %v56
    %v59 = vmul.f32 %v43, %v57
    %v60 = vlaneseq
    %v61 = vshrl.u32 %v60, 7
    %v62 = vsub.s32 0, %v61
    %v63 = vrot.slane %v30, %v62
    %v64 = vmul.f32 %v58, %v63
    %v65 = vmul.f32 %v59, %v63
    %v66 = vlaneseq
    %v67 = vshrl.u32 %v66, 7
    %v68 = vsub.s32 0, %v67
    %v69 = vrot.slane %v31, %v68
    %v70 = vadd.f32 %v64, %v69
    %v71 = vadd.f32 %v65, %v69
    %v72 = vld [vmem:[%s2] sm:$0xff]
    %v73 = vld [vmem:[%s2 + $0x8] sm:$0xff]
    %v74 = vld [vmem:[%s2 + $0x10] sm:$0xff]
    %v75 = vld [vmem:[%s2 + $0x18] sm:$0xff]
    %v76 = vld [vmem:[%s2 + $0x190] sm:$0x1]
    %v77 = vlaneseq
    %v78 = vshrl.u32 %v77, 7
    %v79 = vsub.s32 0, %v78
    %v80 = vrot.slane %v76, %v79
    %v82 = vsel %vm32, %v70, 0
    %v85 = vsel %vm32, %v71, 0
    %87 = vmatprep.subr.mxu0 0.0
    %88 = vmatpush1.msra.mxu0 0.0
    %89 = vmatprep.subr.mxu0 0.0
    %90 = vmatpush1.msra.mxu0 0.0
    %91 = vmatprep.subr.mxu0 0.0
    %92 = vmatpush1.msra.mxu0 0.0
    %93 = vmatprep.subr.mxu0 0.0
    %94 = vmatpush1.msra.mxu0 0.0
    %95 = vmatprep.subr.mxu0 0.0
    %96 = vmatpush1.msra.mxu0 0.0
    %97 = vmatprep.subr.mxu0 0.0
    %98 = vmatpush1.msra.mxu0 0.0
    %99 = vmatprep.subr.mxu0 0.0
    %100 = vmatpush1.msra.mxu0 0.0
    %101 = vmatprep.subr.mxu0 0.0
    %102 = vmatpush1.msra.mxu0 0.0
    %103 = vmatprep.subr.mxu0 0.0
    %104 = vmatpush1.msra.mxu0 0.0
    %105 = vmatprep.subr.mxu0 0.0
    %106 = vmatpush1.msra.mxu0 0.0
    %107 = vmatprep.subr.mxu0 0.0
    %108 = vmatpush1.msra.mxu0 0.0
    %109 = vmatprep.subr.mxu0 0.0
    %110 = vmatpush1.msra.mxu0 0.0
    %111 = vmatprep.subr.mxu0 0.0
    %112 = vmatpush1.msra.mxu0 %v75
    %113 = vmatprep.subr.mxu0 0.0
    %114 = vmatpush1.msra.mxu0 %v74
    %115 = vmatprep.subr.mxu0 0.0
    %116 = vmatpush1.msra.mxu0 %v73
    %117 = vmatprep.subr.mxu0 0.0
    %118 = vmatpush1.msra.mxu0 %v72
    %119 = vmatprep.subr.mxu0 0.0
    %120 = vmatpush2.msra.mxu0 0.0
    %121 = vmatprep.subr.mxu0 0.0
    %122 = vmatpush2.msra.mxu0 0.0
    %123 = vmatprep.subr.mxu0 0.0
    %124 = vmatpush2.msra.mxu0 0.0
    %125 = vmatprep.subr.mxu0 0.0
    %126 = vmatpush2.msra.mxu0 0.0
    %127 = vmatprep.subr.mxu0 0.0
    %128 = vmatpush2.msra.mxu0 0.0
    %129 = vmatprep.subr.mxu0 0.0
    %130 = vmatpush2.msra.mxu0 0.0
    %131 = vmatprep.subr.mxu0 0.0
    %132 = vmatpush2.msra.mxu0 0.0
    %133 = vmatprep.subr.mxu0 0.0
    %134 = vmatpush2.msra.mxu0 0.0
    %135 = vmatprep.subr.mxu0 0.0
    %136 = vmatpush2.msra.mxu0 0.0
    %137 = vmatprep.subr.mxu0 0.0
    %138 = vmatpush2.msra.mxu0 0.0
    %139 = vmatprep.subr.mxu0 0.0
    %140 = vmatpush2.msra.mxu0 0.0
    %141 = vmatprep.subr.mxu0 0.0
    %142 = vmatpush2.msra.mxu0 0.0
    %143 = vmatprep.subr.mxu0 0.0
    %144 = vmatpush2.msra.mxu0 0.0
    %145 = vmatprep.subr.mxu0 0.0
    %146 = vmatpush2.msra.mxu0 0.0
    %147 = vmatprep.subr.mxu0 0.0
    %148 = vmatpush2.msra.mxu0 0.0
    %149 = vmatprep.subr.mxu0 0.0
    %150 = vmatpush2.msra.mxu0 0.0
    %151 = vmatprep.mubr.f32.mxu0 0.0
    %152 = vmatmul.mubr.f32.gmra.mxu0 %v82
    %v153 = vpop.f32.mrf.mxu0
    %v154 = vadd.f32 %v80, %v153
    %v155 = vpop.f32.mrf.mxu0
    %156 = vmatprep.mubr.f32.mxu0 0.0
    %157 = vmatmul.mubr.f32.gmra.mxu0 %v85
    %v158 = vpop.f32.mrf.mxu0
    %v159 = vadd.f32 %v80, %v158
    %v160 = vpop.f32.mrf.mxu0
    %161 = vdwg.mxu0
    %v162 = vld [vmem:[%s2 + $0x20] sm:$0xff]
    %v163 = vld [vmem:[%s2 + $0x28] sm:$0xff]
    %v164 = vld [vmem:[%s2 + $0x30] sm:$0xff]
    %v165 = vld [vmem:[%s2 + $0x38] sm:$0xff]
    %v166 = vld [vmem:[%s2 + $0x198] sm:$0x1]
    %v167 = vlaneseq
    %v168 = vshrl.u32 %v167, 7
    %v169 = vsub.s32 0, %v168
    %v170 = vrot.slane %v166, %v169
    %171 = vmatprep.subr.mxu0 0.0
    %172 = vmatpush1.msra.mxu0 0.0
    %173 = vmatprep.subr.mxu0 0.0
    %174 = vmatpush1.msra.mxu0 0.0
    %175 = vmatprep.subr.mxu0 0.0
    %176 = vmatpush1.msra.mxu0 0.0
    %177 = vmatprep.subr.mxu0 0.0
    %178 = vmatpush1.msra.mxu0 0.0
    %179 = vmatprep.subr.mxu0 0.0
    %180 = vmatpush1.msra.mxu0 0.0
    %181 = vmatprep.subr.mxu0 0.0
    %182 = vmatpush1.msra.mxu0 0.0
    %183 = vmatprep.subr.mxu0 0.0
    %184 = vmatpush1.msra.mxu0 0.0
    %185 = vmatprep.subr.mxu0 0.0
    %186 = vmatpush1.msra.mxu0 0.0
    %187 = vmatprep.subr.mxu0 0.0
    %188 = vmatpush1.msra.mxu0 0.0
    %189 = vmatprep.subr.mxu0 0.0
    %190 = vmatpush1.msra.mxu0 0.0
    %191 = vmatprep.subr.mxu0 0.0
    %192 = vmatpush1.msra.mxu0 0.0
    %193 = vmatprep.subr.mxu0 0.0
    %194 = vmatpush1.msra.mxu0 0.0
    %195 = vmatprep.subr.mxu0 0.0
    %196 = vmatpush1.msra.mxu0 %v165
    %197 = vmatprep.subr.mxu0 0.0
    %198 = vmatpush1.msra.mxu0 %v164
    %199 = vmatprep.subr.mxu0 0.0
    %200 = vmatpush1.msra.mxu0 %v163
    %201 = vmatprep.subr.mxu0 0.0
    %202 = vmatpush1.msra.mxu0 %v162
    %203 = vmatprep.subr.mxu0 0.0
    %204 = vmatpush2.msra.mxu0 0.0
    %205 = vmatprep.subr.mxu0 0.0
    %206 = vmatpush2.msra.mxu0 0.0
    %207 = vmatprep.subr.mxu0 0.0
    %208 = vmatpush2.msra.mxu0 0.0
    %209 = vmatprep.subr.mxu0 0.0
    %210 = vmatpush2.msra.mxu0 0.0
    %211 = vmatprep.subr.mxu0 0.0
    %212 = vmatpush2.msra.mxu0 0.0
    %213 = vmatprep.subr.mxu0 0.0
    %214 = vmatpush2.msra.mxu0 0.0
    %215 = vmatprep.subr.mxu0 0.0
    %216 = vmatpush2.msra.mxu0 0.0
    %217 = vmatprep.subr.mxu0 0.0
    %218 = vmatpush2.msra.mxu0 0.0
    %219 = vmatprep.subr.mxu0 0.0
    %220 = vmatpush2.msra.mxu0 0.0
    %221 = vmatprep.subr.mxu0 0.0
    %222 = vmatpush2.msra.mxu0 0.0
    %223 = vmatprep.subr.mxu0 0.0
    %224 = vmatpush2.msra.mxu0 0.0
    %225 = vmatprep.subr.mxu0 0.0
    %226 = vmatpush2.msra.mxu0 0.0
    %227 = vmatprep.subr.mxu0 0.0
    %228 = vmatpush2.msra.mxu0 0.0
    %229 = vmatprep.subr.mxu0 0.0
    %230 = vmatpush2.msra.mxu0 0.0
    %231 = vmatprep.subr.mxu0 0.0
    %232 = vmatpush2.msra.mxu0 0.0
    %233 = vmatprep.subr.mxu0 0.0
    %234 = vmatpush2.msra.mxu0 0.0
    %235 = vmatprep.mubr.f32.mxu0 0.0
    %236 = vmatmul.mubr.f32.gmra.mxu0 %v82
    %v237 = vpop.f32.mrf.mxu0
    %v238 = vadd.f32 %v170, %v237
    %v239 = vpop.f32.mrf.mxu0
    %240 = vmatprep.mubr.f32.mxu0 0.0
    %241 = vmatmul.mubr.f32.gmra.mxu0 %v85
    %v242 = vpop.f32.mrf.mxu0
    %v243 = vadd.f32 %v170, %v242
    %v244 = vpop.f32.mrf.mxu0
    %245 = vdwg.mxu0
    %v246 = vld [vmem:[%s2 + $0x40] sm:$0xff]
    %v247 = vld [vmem:[%s2 + $0x48] sm:$0xff]
    %v248 = vld [vmem:[%s2 + $0x50] sm:$0xff]
    %v249 = vld [vmem:[%s2 + $0x58] sm:$0xff]
    %v250 = vld [vmem:[%s2 + $0x1a0] sm:$0x1]
    %v251 = vlaneseq
    %v252 = vshrl.u32 %v251, 7
    %v253 = vsub.s32 0, %v252
    %v254 = vrot.slane %v250, %v253
    %255 = vmatprep.subr.mxu0 0.0
    %256 = vmatpush1.msra.mxu0 0.0
    %257 = vmatprep.subr.mxu0 0.0
    %258 = vmatpush1.msra.mxu0 0.0
    %259 = vmatprep.subr.mxu0 0.0
    %260 = vmatpush1.msra.mxu0 0.0
    %261 = vmatprep.subr.mxu0 0.0
    %262 = vmatpush1.msra.mxu0 0.0
    %263 = vmatprep.subr.mxu0 0.0
    %264 = vmatpush1.msra.mxu0 0.0
    %265 = vmatprep.subr.mxu0 0.0
    %266 = vmatpush1.msra.mxu0 0.0
    %267 = vmatprep.subr.mxu0 0.0
    %268 = vmatpush1.msra.mxu0 0.0
    %269 = vmatprep.subr.mxu0 0.0
    %270 = vmatpush1.msra.mxu0 0.0
    %271 = vmatprep.subr.mxu0 0.0
    %272 = vmatpush1.msra.mxu0 0.0
    %273 = vmatprep.subr.mxu0 0.0
    %274 = vmatpush1.msra.mxu0 0.0
    %275 = vmatprep.subr.mxu0 0.0
    %276 = vmatpush1.msra.mxu0 0.0
    %277 = vmatprep.subr.mxu0 0.0
    %278 = vmatpush1.msra.mxu0 0.0
    %279 = vmatprep.subr.mxu0 0.0
    %280 = vmatpush1.msra.mxu0 %v249
    %281 = vmatprep.subr.mxu0 0.0
    %282 = vmatpush1.msra.mxu0 %v248
    %283 = vmatprep.subr.mxu0 0.0
    %284 = vmatpush1.msra.mxu0 %v247
    %285 = vmatprep.subr.mxu0 0.0
    %286 = vmatpush1.msra.mxu0 %v246
    %287 = vmatprep.subr.mxu0 0.0
    %288 = vmatpush2.msra.mxu0 0.0
    %289 = vmatprep.subr.mxu0 0.0
    %290 = vmatpush2.msra.mxu0 0.0
    %291 = vmatprep.subr.mxu0 0.0
    %292 = vmatpush2.msra.mxu0 0.0
    %293 = vmatprep.subr.mxu0 0.0
    %294 = vmatpush2.msra.mxu0 0.0
    %295 = vmatprep.subr.mxu0 0.0
    %296 = vmatpush2.msra.mxu0 0.0
    %297 = vmatprep.subr.mxu0 0.0
    %298 = vmatpush2.msra.mxu0 0.0
    %299 = vmatprep.subr.mxu0 0.0
    %300 = vmatpush2.msra.mxu0 0.0
    %301 = vmatprep.subr.mxu0 0.0
    %302 = vmatpush2.msra.mxu0 0.0
    %303 = vmatprep.subr.mxu0 0.0
    %304 = vmatpush2.msra.mxu0 0.0
    %305 = vmatprep.subr.mxu0 0.0
    %306 = vmatpush2.msra.mxu0 0.0
    %307 = vmatprep.subr.mxu0 0.0
    %308 = vmatpush2.msra.mxu0 0.0
    %309 = vmatprep.subr.mxu0 0.0
    %310 = vmatpush2.msra.mxu0 0.0
    %311 = vmatprep.subr.mxu0 0.0
    %312 = vmatpush2.msra.mxu0 0.0
    %313 = vmatprep.subr.mxu0 0.0
    %314 = vmatpush2.msra.mxu0 0.0
    %315 = vmatprep.subr.mxu0 0.0
    %316 = vmatpush2.msra.mxu0 0.0
    %317 = vmatprep.subr.mxu0 0.0
    %318 = vmatpush2.msra.mxu0 0.0
    %319 = vmatprep.mubr.f32.mxu0 0.0
    %320 = vmatmul.mubr.f32.gmra.mxu0 %v82
    %v321 = vpop.f32.mrf.mxu0
    %v322 = vadd.f32 %v254, %v321
    %v323 = vpop.f32.mrf.mxu0
    %324 = vmatprep.mubr.f32.mxu0 0.0
    %325 = vmatmul.mubr.f32.gmra.mxu0 %v85
    %v326 = vpop.f32.mrf.mxu0
    %v327 = vadd.f32 %v254, %v326
    %v328 = vpop.f32.mrf.mxu0
    %329 = vdwg.mxu0
    %v330 = vld [vmem:[%s2 + $0xe0] sm:$0xff]
    %v331 = vld [vmem:[%s2 + $0xe8] sm:$0xff]
    %v332 = vld [vmem:[%s2 + $0xf0] sm:$0xff]
    %v333 = vld [vmem:[%s2 + $0xf8] sm:$0xff]
    %v334 = vld [vmem:[%s2 + $0x100] sm:$0xff]
    %v335 = vld [vmem:[%s2 + $0x108] sm:$0xff]
    %v336 = vld [vmem:[%s2 + $0x110] sm:$0xff]
    %v337 = vld [vmem:[%s2 + $0x118] sm:$0xff]
    %v338 = vmul.f32 %v238, %v330
    %v339 = vmul.f32 %v243, %v331
    %v340 = vmul.f32 %v238, %v332
    %v341 = vmul.f32 %v243, %v333
    %v342 = vmul.f32 %v238, %v334
    %v343 = vmul.f32 %v243, %v335
    %v344 = vmul.f32 %v238, %v336
    %v345 = vmul.f32 %v243, %v337
    %v346 = vmul.f32 %v322, %v330
    %v347 = vmul.f32 %v327, %v331
    %v348 = vmul.f32 %v322, %v332
    %v349 = vmul.f32 %v327, %v333
    %v350 = vmul.f32 %v322, %v334
    %v351 = vmul.f32 %v327, %v335
    %v352 = vmul.f32 %v322, %v336
    %v353 = vmul.f32 %v327, %v337
    %v355 = vsel %vm32, %v154, 0
    %v358 = vsel %vm32, %v159, 0
    %v361 = vsel %vm32, %v338, 0
    %v364 = vsel %vm32, %v339, 0
    %v367 = vsel %vm32, %v340, 0
    %v370 = vsel %vm32, %v341, 0
    %v373 = vsel %vm32, %v342, 0
    %v376 = vsel %vm32, %v343, 0
    %v379 = vsel %vm32, %v344, 0
    %v382 = vsel %vm32, %v345, 0
    %384 = vmatprep.subr.mxu0 0.0
    %385 = vmatpush1.xpose.msra.mxu0 0.0
    %386 = vmatprep.subr.mxu0 0.0
    %387 = vmatpush1.xpose.msra.mxu0 0.0
    %388 = vmatprep.subr.mxu0 0.0
    %389 = vmatpush1.xpose.msra.mxu0 0.0
    %390 = vmatprep.subr.mxu0 0.0
    %391 = vmatpush1.xpose.msra.mxu0 0.0
    %392 = vmatprep.subr.mxu0 0.0
    %393 = vmatpush1.xpose.msra.mxu0 0.0
    %394 = vmatprep.subr.mxu0 0.0
    %395 = vmatpush1.xpose.msra.mxu0 0.0
    %396 = vmatprep.subr.mxu0 0.0
    %397 = vmatpush1.xpose.msra.mxu0 0.0
    %398 = vmatprep.subr.mxu0 0.0
    %399 = vmatpush1.xpose.msra.mxu0 0.0
    %400 = vmatprep.subr.mxu0 0.0
    %401 = vmatpush1.xpose.msra.mxu0 %v382
    %402 = vmatprep.subr.mxu0 0.0
    %403 = vmatpush1.xpose.msra.mxu0 %v379
    %404 = vmatprep.subr.mxu0 0.0
    %405 = vmatpush1.xpose.msra.mxu0 %v376
    %406 = vmatprep.subr.mxu0 0.0
    %407 = vmatpush1.xpose.msra.mxu0 %v373
    %408 = vmatprep.subr.mxu0 0.0
    %409 = vmatpush1.xpose.msra.mxu0 %v370
    %410 = vmatprep.subr.mxu0 0.0
    %411 = vmatpush1.xpose.msra.mxu0 %v367
    %412 = vmatprep.subr.mxu0 0.0
    %413 = vmatpush1.xpose.msra.mxu0 %v364
    %414 = vmatprep.subr.mxu0 0.0
    %415 = vmatpush1.xpose.msra.mxu0 %v361
    %416 = vmatprep.subr.mxu0 0.0
    %417 = vmatpush2.xpose.msra.mxu0 0.0
    %418 = vmatprep.subr.mxu0 0.0
    %419 = vmatpush2.xpose.msra.mxu0 0.0
    %420 = vmatprep.subr.mxu0 0.0
    %421 = vmatpush2.xpose.msra.mxu0 0.0
    %422 = vmatprep.subr.mxu0 0.0
    %423 = vmatpush2.xpose.msra.mxu0 0.0
    %424 = vmatprep.subr.mxu0 0.0
    %425 = vmatpush2.xpose.msra.mxu0 0.0
    %426 = vmatprep.subr.mxu0 0.0
    %427 = vmatpush2.xpose.msra.mxu0 0.0
    %428 = vmatprep.subr.mxu0 0.0
    %429 = vmatpush2.xpose.msra.mxu0 0.0
    %430 = vmatprep.subr.mxu0 0.0
    %431 = vmatpush2.xpose.msra.mxu0 0.0
    %432 = vmatprep.subr.mxu0 0.0
    %433 = vmatpush2.xpose.msra.mxu0 0.0
    %434 = vmatprep.subr.mxu0 0.0
    %435 = vmatpush2.xpose.msra.mxu0 0.0
    %436 = vmatprep.subr.mxu0 0.0
    %437 = vmatpush2.xpose.msra.mxu0 0.0
    %438 = vmatprep.subr.mxu0 0.0
    %439 = vmatpush2.xpose.msra.mxu0 0.0
    %440 = vmatprep.subr.mxu0 0.0
    %441 = vmatpush2.xpose.msra.mxu0 0.0
    %442 = vmatprep.subr.mxu0 0.0
    %443 = vmatpush2.xpose.msra.mxu0 0.0
    %444 = vmatprep.subr.mxu0 0.0
    %445 = vmatpush2.xpose.msra.mxu0 0.0
    %446 = vmatprep.subr.mxu0 0.0
    %447 = vmatpush2.xpose.msra.mxu0 0.0
    %448 = vmatprep.mubr.f32.mxu0 0.0
    %449 = vmatmul.mubr.f32.gmra.mxu0 %v355
    %v450 = vpop.f32.mrf.mxu0
    %v451 = vadd.f32 %v28, %v450
    %v452 = vpop.f32.mrf.mxu0
    %453 = vmatprep.mubr.f32.mxu0 0.0
    %454 = vmatmul.mubr.f32.gmra.mxu0 %v358
    %v455 = vpop.f32.mrf.mxu0
    %v456 = vadd.f32 %v29, %v455
    %v457 = vpop.f32.mrf.mxu0
    %458 = vdwg.mxu0
    %vm459 = vcmask 523264
    %v460 = vsel %vm459, %v451, -inf
    %461 = vmax.xlane.f32.xlu0 %v460
    %v462 = vpop.xlane.xlu0 %461
    %v463 = vsel %vm459, %v456, -inf
    %464 = vmax.xlane.f32.xlu0 %v463
    %v465 = vpop.xlane.xlu0 %464
    %v466 = vsub.f32 %v451, %v462
    %v467 = vsub.f32 %v456, %v465
    %v468 = vmul.f32 %v466, 1.442695
    %v469 = vpow.pop %v468
    %v470 = vmul.f32 %v467, 1.442695
    %v471 = vpow.pop %v470
    %v472 = vld [vmem:[%s2 + $0x120] sm:$0xff]
    %v473 = vld [vmem:[%s2 + $0x128] sm:$0xff]
    %v474 = vld [vmem:[%s2 + $0x130] sm:$0xff]
    %v475 = vld [vmem:[%s2 + $0x138] sm:$0xff]
    %v476 = vld [vmem:[%s2 + $0x140] sm:$0xff]
    %v477 = vld [vmem:[%s2 + $0x148] sm:$0xff]
    %v478 = vld [vmem:[%s2 + $0x150] sm:$0xff]
    %v479 = vld [vmem:[%s2 + $0x158] sm:$0xff]
    %v481 = vsel %vm459, %v469, 0
    %v484 = vsel %vm459, %v471, 0
    %486 = vmatprep.subr.mxu0 0.0
    %487 = vmatpush1.msra.mxu0 0.0
    %488 = vmatprep.subr.mxu0 0.0
    %489 = vmatpush1.msra.mxu0 0.0
    %490 = vmatprep.subr.mxu0 0.0
    %491 = vmatpush1.msra.mxu0 0.0
    %492 = vmatprep.subr.mxu0 0.0
    %493 = vmatpush1.msra.mxu0 0.0
    %494 = vmatprep.subr.mxu0 0.0
    %495 = vmatpush1.msra.mxu0 0.0
    %496 = vmatprep.subr.mxu0 0.0
    %497 = vmatpush1.msra.mxu0 0.0
    %498 = vmatprep.subr.mxu0 0.0
    %499 = vmatpush1.msra.mxu0 0.0
    %500 = vmatprep.subr.mxu0 0.0
    %501 = vmatpush1.msra.mxu0 0.0
    %502 = vmatprep.subr.mxu0 0.0
    %503 = vmatpush1.msra.mxu0 %v479
    %504 = vmatprep.subr.mxu0 0.0
    %505 = vmatpush1.msra.mxu0 %v478
    %506 = vmatprep.subr.mxu0 0.0
    %507 = vmatpush1.msra.mxu0 %v477
    %508 = vmatprep.subr.mxu0 0.0
    %509 = vmatpush1.msra.mxu0 %v476
    %510 = vmatprep.subr.mxu0 0.0
    %511 = vmatpush1.msra.mxu0 %v475
    %512 = vmatprep.subr.mxu0 0.0
    %513 = vmatpush1.msra.mxu0 %v474
    %514 = vmatprep.subr.mxu0 0.0
    %515 = vmatpush1.msra.mxu0 %v473
    %516 = vmatprep.subr.mxu0 0.0
    %517 = vmatpush1.msra.mxu0 %v472
    %518 = vmatprep.subr.mxu0 0.0
    %519 = vmatpush2.msra.mxu0 0.0
    %520 = vmatprep.subr.mxu0 0.0
    %521 = vmatpush2.msra.mxu0 0.0
    %522 = vmatprep.subr.mxu0 0.0
    %523 = vmatpush2.msra.mxu0 0.0
    %524 = vmatprep.subr.mxu0 0.0
    %525 = vmatpush2.msra.mxu0 0.0
    %526 = vmatprep.subr.mxu0 0.0
    %527 = vmatpush2.msra.mxu0 0.0
    %528 = vmatprep.subr.mxu0 0.0
    %529 = vmatpush2.msra.mxu0 0.0
    %530 = vmatprep.subr.mxu0 0.0
    %531 = vmatpush2.msra.mxu0 0.0
    %532 = vmatprep.subr.mxu0 0.0
    %533 = vmatpush2.msra.mxu0 0.0
    %534 = vmatprep.subr.mxu0 0.0
    %535 = vmatpush2.msra.mxu0 0.0
    %536 = vmatprep.subr.mxu0 0.0
    %537 = vmatpush2.msra.mxu0 0.0
    %538 = vmatprep.subr.mxu0 0.0
    %539 = vmatpush2.msra.mxu0 0.0
    %540 = vmatprep.subr.mxu0 0.0
    %541 = vmatpush2.msra.mxu0 0.0
    %542 = vmatprep.subr.mxu0 0.0
    %543 = vmatpush2.msra.mxu0 0.0
    %544 = vmatprep.subr.mxu0 0.0
    %545 = vmatpush2.msra.mxu0 0.0
    %546 = vmatprep.subr.mxu0 0.0
    %547 = vmatpush2.msra.mxu0 0.0
    %548 = vmatprep.subr.mxu0 0.0
    %549 = vmatpush2.msra.mxu0 0.0
    %550 = vmatprep.mubr.f32.mxu0 0.0
    %551 = vmatmul.mubr.f32.gmra.mxu0 %v481
    %v552 = vpop.f32.mrf.mxu0
    %v553 = vadd.f32 0.0, %v552
    %v554 = vpop.f32.mrf.mxu0
    %555 = vmatprep.mubr.f32.mxu0 0.0
    %556 = vmatmul.mubr.f32.gmra.mxu0 %v484
    %v557 = vpop.f32.mrf.mxu0
    %v558 = vadd.f32 0.0, %v557
    %v559 = vpop.f32.mrf.mxu0
    %560 = vdwg.mxu0
    %v561 = vrcp.pop %v553
    %v562 = vmul.f32 %v469, %v561
    %v563 = vrcp.pop %v558
    %v564 = vmul.f32 %v471, %v563
    %v566 = vsel %vm459, %v562, 0
    %v569 = vsel %vm459, %v564, 0
    %571 = vmatprep.subr.mxu0 0.0
    %572 = vmatpush1.msra.mxu0 0.0
    %573 = vmatprep.subr.mxu0 0.0
    %574 = vmatpush1.msra.mxu0 0.0
    %575 = vmatprep.subr.mxu0 0.0
    %576 = vmatpush1.msra.mxu0 0.0
    %577 = vmatprep.subr.mxu0 0.0
    %578 = vmatpush1.msra.mxu0 0.0
    %579 = vmatprep.subr.mxu0 0.0
    %580 = vmatpush1.msra.mxu0 0.0
    %581 = vmatprep.subr.mxu0 0.0
    %582 = vmatpush1.msra.mxu0 0.0
    %583 = vmatprep.subr.mxu0 0.0
    %584 = vmatpush1.msra.mxu0 0.0
    %585 = vmatprep.subr.mxu0 0.0
    %586 = vmatpush1.msra.mxu0 0.0
    %587 = vmatprep.subr.mxu0 0.0
    %588 = vmatpush1.msra.mxu0 %v353
    %589 = vmatprep.subr.mxu0 0.0
    %590 = vmatpush1.msra.mxu0 %v352
    %591 = vmatprep.subr.mxu0 0.0
    %592 = vmatpush1.msra.mxu0 %v351
    %593 = vmatprep.subr.mxu0 0.0
    %594 = vmatpush1.msra.mxu0 %v350
    %595 = vmatprep.subr.mxu0 0.0
    %596 = vmatpush1.msra.mxu0 %v349
    %597 = vmatprep.subr.mxu0 0.0
    %598 = vmatpush1.msra.mxu0 %v348
    %599 = vmatprep.subr.mxu0 0.0
    %600 = vmatpush1.msra.mxu0 %v347
    %601 = vmatprep.subr.mxu0 0.0
    %602 = vmatpush1.msra.mxu0 %v346
    %603 = vmatprep.subr.mxu0 0.0
    %604 = vmatpush2.msra.mxu0 0.0
    %605 = vmatprep.subr.mxu0 0.0
    %606 = vmatpush2.msra.mxu0 0.0
    %607 = vmatprep.subr.mxu0 0.0
    %608 = vmatpush2.msra.mxu0 0.0
    %609 = vmatprep.subr.mxu0 0.0
    %610 = vmatpush2.msra.mxu0 0.0
    %611 = vmatprep.subr.mxu0 0.0
    %612 = vmatpush2.msra.mxu0 0.0
    %613 = vmatprep.subr.mxu0 0.0
    %614 = vmatpush2.msra.mxu0 0.0
    %615 = vmatprep.subr.mxu0 0.0
    %616 = vmatpush2.msra.mxu0 0.0
    %617 = vmatprep.subr.mxu0 0.0
    %618 = vmatpush2.msra.mxu0 0.0
    %619 = vmatprep.subr.mxu0 0.0
    %620 = vmatpush2.msra.mxu0 0.0
    %621 = vmatprep.subr.mxu0 0.0
    %622 = vmatpush2.msra.mxu0 0.0
    %623 = vmatprep.subr.mxu0 0.0
    %624 = vmatpush2.msra.mxu0 0.0
    %625 = vmatprep.subr.mxu0 0.0
    %626 = vmatpush2.msra.mxu0 0.0
    %627 = vmatprep.subr.mxu0 0.0
    %628 = vmatpush2.msra.mxu0 0.0
    %629 = vmatprep.subr.mxu0 0.0
    %630 = vmatpush2.msra.mxu0 0.0
    %631 = vmatprep.subr.mxu0 0.0
    %632 = vmatpush2.msra.mxu0 0.0
    %633 = vmatprep.subr.mxu0 0.0
    %634 = vmatpush2.msra.mxu0 0.0
    %635 = vmatprep.mubr.f32.mxu0 0.0
    %636 = vmatmul.mubr.f32.gmra.mxu0 %v566
    %v637 = vpop.f32.mrf.mxu0
    %v638 = vadd.f32 0.0, %v637
    %v639 = vpop.f32.mrf.mxu0
    %640 = vmatprep.mubr.f32.mxu0 0.0
    %641 = vmatmul.mubr.f32.gmra.mxu0 %v569
    %v642 = vpop.f32.mrf.mxu0
    %v643 = vadd.f32 0.0, %v642
    %v644 = vpop.f32.mrf.mxu0
    %645 = vdwg.mxu0
    %v646 = vld [vmem:[%s2 + $0x60] sm:$0xff]
    %v647 = vld [vmem:[%s2 + $0x68] sm:$0xff]
    %v648 = vld [vmem:[%s2 + $0x70] sm:$0xff]
    %v649 = vld [vmem:[%s2 + $0x78] sm:$0xff]
    %v650 = vld [vmem:[%s2 + $0x1a8] sm:$0x1]
    %v651 = vlaneseq
    %v652 = vshrl.u32 %v651, 7
    %v653 = vsub.s32 0, %v652
    %v654 = vrot.slane %v650, %v653
    %v656 = vsel %vm32, %v638, 0
    %v659 = vsel %vm32, %v643, 0
    %661 = vmatprep.subr.mxu0 0.0
    %662 = vmatpush1.msra.mxu0 0.0
    %663 = vmatprep.subr.mxu0 0.0
    %664 = vmatpush1.msra.mxu0 0.0
    %665 = vmatprep.subr.mxu0 0.0
    %666 = vmatpush1.msra.mxu0 0.0
    %667 = vmatprep.subr.mxu0 0.0
    %668 = vmatpush1.msra.mxu0 0.0
    %669 = vmatprep.subr.mxu0 0.0
    %670 = vmatpush1.msra.mxu0 0.0
    %671 = vmatprep.subr.mxu0 0.0
    %672 = vmatpush1.msra.mxu0 0.0
    %673 = vmatprep.subr.mxu0 0.0
    %674 = vmatpush1.msra.mxu0 0.0
    %675 = vmatprep.subr.mxu0 0.0
    %676 = vmatpush1.msra.mxu0 0.0
    %677 = vmatprep.subr.mxu0 0.0
    %678 = vmatpush1.msra.mxu0 0.0
    %679 = vmatprep.subr.mxu0 0.0
    %680 = vmatpush1.msra.mxu0 0.0
    %681 = vmatprep.subr.mxu0 0.0
    %682 = vmatpush1.msra.mxu0 0.0
    %683 = vmatprep.subr.mxu0 0.0
    %684 = vmatpush1.msra.mxu0 0.0
    %685 = vmatprep.subr.mxu0 0.0
    %686 = vmatpush1.msra.mxu0 %v649
    %687 = vmatprep.subr.mxu0 0.0
    %688 = vmatpush1.msra.mxu0 %v648
    %689 = vmatprep.subr.mxu0 0.0
    %690 = vmatpush1.msra.mxu0 %v647
    %691 = vmatprep.subr.mxu0 0.0
    %692 = vmatpush1.msra.mxu0 %v646
    %693 = vmatprep.subr.mxu0 0.0
    %694 = vmatpush2.msra.mxu0 0.0
    %695 = vmatprep.subr.mxu0 0.0
    %696 = vmatpush2.msra.mxu0 0.0
    %697 = vmatprep.subr.mxu0 0.0
    %698 = vmatpush2.msra.mxu0 0.0
    %699 = vmatprep.subr.mxu0 0.0
    %700 = vmatpush2.msra.mxu0 0.0
    %701 = vmatprep.subr.mxu0 0.0
    %702 = vmatpush2.msra.mxu0 0.0
    %703 = vmatprep.subr.mxu0 0.0
    %704 = vmatpush2.msra.mxu0 0.0
    %705 = vmatprep.subr.mxu0 0.0
    %706 = vmatpush2.msra.mxu0 0.0
    %707 = vmatprep.subr.mxu0 0.0
    %708 = vmatpush2.msra.mxu0 0.0
    %709 = vmatprep.subr.mxu0 0.0
    %710 = vmatpush2.msra.mxu0 0.0
    %711 = vmatprep.subr.mxu0 0.0
    %712 = vmatpush2.msra.mxu0 0.0
    %713 = vmatprep.subr.mxu0 0.0
    %714 = vmatpush2.msra.mxu0 0.0
    %715 = vmatprep.subr.mxu0 0.0
    %716 = vmatpush2.msra.mxu0 0.0
    %717 = vmatprep.subr.mxu0 0.0
    %718 = vmatpush2.msra.mxu0 0.0
    %719 = vmatprep.subr.mxu0 0.0
    %720 = vmatpush2.msra.mxu0 0.0
    %721 = vmatprep.subr.mxu0 0.0
    %722 = vmatpush2.msra.mxu0 0.0
    %723 = vmatprep.subr.mxu0 0.0
    %724 = vmatpush2.msra.mxu0 0.0
    %725 = vmatprep.mubr.f32.mxu0 0.0
    %726 = vmatmul.mubr.f32.gmra.mxu0 %v656
    %v727 = vpop.f32.mrf.mxu0
    %v728 = vadd.f32 %v654, %v727
    %v729 = vpop.f32.mrf.mxu0
    %730 = vmatprep.mubr.f32.mxu0 0.0
    %731 = vmatmul.mubr.f32.gmra.mxu0 %v659
    %v732 = vpop.f32.mrf.mxu0
    %v733 = vadd.f32 %v654, %v732
    %v734 = vpop.f32.mrf.mxu0
    %735 = vdwg.mxu0
    %v736 = vadd.f32 %v15, %v728
    %v737 = vadd.f32 %v16, %v733
    %v738 = vld [vmem:[%s2 + $0x180] sm:$0x1]
    %v739 = vld [vmem:[%s2 + $0x188] sm:$0x1]
    %v740 = vsel %vm32, %v736, 0.0
    %741 = vadd.xlane.f32.xlu0 %v740
    %v742 = vpop.xlane.xlu0 %741
    %v743 = vsel %vm32, %v737, 0.0
    %744 = vadd.xlane.f32.xlu0 %v743
    %v745 = vpop.xlane.xlu0 %744
    %v746 = vmul.f32 %v742, %v39
    %v747 = vmul.f32 %v745, %v39
    %v748 = vsub.f32 %v736, %v746
    %v749 = vsub.f32 %v737, %v747
    %v750 = vmul.f32 %v748, %v748
    %v751 = vmul.f32 %v749, %v749
    %v752 = vsel %vm32, %v750, 0.0
    %753 = vadd.xlane.f32.xlu0 %v752
    %v754 = vpop.xlane.xlu0 %753
    %v755 = vsel %vm32, %v751, 0.0
    %756 = vadd.xlane.f32.xlu0 %v755
    %v757 = vpop.xlane.xlu0 %756
    %v758 = vmul.f32 %v754, %v39
    %v759 = vmul.f32 %v757, %v39
    %v760 = vadd.f32 %v758, 1e-06
    %v761 = vadd.f32 %v759, 1e-06
    %v762 = vrsqrt.pop %v760
    %v763 = vrsqrt.pop %v761
    %v764 = vmul.f32 %v748, %v762
    %v765 = vmul.f32 %v749, %v763
    %v766 = vlaneseq
    %v767 = vshrl.u32 %v766, 7
    %v768 = vsub.s32 0, %v767
    %v769 = vrot.slane %v738, %v768
    %v770 = vmul.f32 %v764, %v769
    %v771 = vmul.f32 %v765, %v769
    %v772 = vlaneseq
    %v773 = vshrl.u32 %v772, 7
    %v774 = vsub.s32 0, %v773
    %v775 = vrot.slane %v739, %v774
    %v776 = vadd.f32 %v770, %v775
    %v777 = vadd.f32 %v771, %v775
    %v778 = vld [vmem:[%s2 + $0x80] sm:$0xff]
    %v779 = vld [vmem:[%s2 + $0x88] sm:$0xff]
    %v780 = vld [vmem:[%s2 + $0x90] sm:$0xff]
    %v781 = vld [vmem:[%s2 + $0x98] sm:$0xff]
    %v782 = vld [vmem:[%s2 + $0x1b0] sm:$0x1]
    %v783 = vlaneseq
    %v784 = vshrl.u32 %v783, 7
    %v785 = vsub.s32 0, %v784
    %v786 = vrot.slane %v782, %v785
    %v788 = vsel %vm32, %v776, 0
    %v791 = vsel %vm32, %v777, 0
    %793 = vmatprep.subr.mxu0 0.0
    %794 = vmatpush1.msra.mxu0 0.0
    %795 = vmatprep.subr.mxu0 0.0
    %796 = vmatpush1.msra.mxu0 0.0
    %797 = vmatprep.subr.mxu0 0.0
    %798 = vmatpush1.msra.mxu0 0.0
    %799 = vmatprep.subr.mxu0 0.0
    %800 = vmatpush1.msra.mxu0 0.0
    %801 = vmatprep.subr.mxu0 0.0
    %802 = vmatpush1.msra.mxu0 0.0
    %803 = vmatprep.subr.mxu0 0.0
    %804 = vmatpush1.msra.mxu0 0.0
    %805 = vmatprep.subr.mxu0 0.0
    %806 = vmatpush1.msra.mxu0 0.0
    %807 = vmatprep.subr.mxu0 0.0
    %808 = vmatpush1.msra.mxu0 0.0
    %809 = vmatprep.subr.mxu0 0.0
    %810 = vmatpush1.msra.mxu0 0.0
    %811 = vmatprep.subr.mxu0 0.0
    %812 = vmatpush1.msra.mxu0 0.0
    %813 = vmatprep.subr.mxu0 0.0
    %814 = vmatpush1.msra.mxu0 0.0
    %815 = vmatprep.subr.mxu0 0.0
    %816 = vmatpush1.msra.mxu0 0.0
    %817 = vmatprep.subr.mxu0 0.0
    %818 = vmatpush1.msra.mxu0 %v781
    %819 = vmatprep.subr.mxu0 0.0
    %820 = vmatpush1.msra.mxu0 %v780
    %821 = vmatprep.subr.mxu0 0.0
    %822 = vmatpush1.msra.mxu0 %v779
    %823 = vmatprep.subr.mxu0 0.0
    %824 = vmatpush1.msra.mxu0 %v778
    %825 = vmatprep.subr.mxu0 0.0
    %826 = vmatpush2.msra.mxu0 0.0
    %827 = vmatprep.subr.mxu0 0.0
    %828 = vmatpush2.msra.mxu0 0.0
    %829 = vmatprep.subr.mxu0 0.0
    %830 = vmatpush2.msra.mxu0 0.0
    %831 = vmatprep.subr.mxu0 0.0
    %832 = vmatpush2.msra.mxu0 0.0
    %833 = vmatprep.subr.mxu0 0.0
    %834 = vmatpush2.msra.mxu0 0.0
    %835 = vmatprep.subr.mxu0 0.0
    %836 = vmatpush2.msra.mxu0 0.0
    %837 = vmatprep.subr.mxu0 0.0
    %838 = vmatpush2.msra.mxu0 0.0
    %839 = vmatprep.subr.mxu0 0.0
    %840 = vmatpush2.msra.mxu0 0.0
    %841 = vmatprep.subr.mxu0 0.0
    %842 = vmatpush2.msra.mxu0 0.0
    %843 = vmatprep.subr.mxu0 0.0
    %844 = vmatpush2.msra.mxu0 0.0
    %845 = vmatprep.subr.mxu0 0.0
    %846 = vmatpush2.msra.mxu0 0.0
    %847 = vmatprep.subr.mxu0 0.0
    %848 = vmatpush2.msra.mxu0 0.0
    %849 = vmatprep.subr.mxu0 0.0
    %850 = vmatpush2.msra.mxu0 0.0
    %851 = vmatprep.subr.mxu0 0.0
    %852 = vmatpush2.msra.mxu0 0.0
    %853 = vmatprep.subr.mxu0 0.0
    %854 = vmatpush2.msra.mxu0 0.0
    %855 = vmatprep.subr.mxu0 0.0
    %856 = vmatpush2.msra.mxu0 0.0
    %857 = vmatprep.mubr.f32.mxu0 0.0
    %858 = vmatmul.mubr.f32.gmra.mxu0 %v788
    %v859 = vpop.f32.mrf.mxu0
    %v860 = vadd.f32 %v786, %v859
    %v861 = vpop.f32.mrf.mxu0
    %862 = vmatprep.mubr.f32.mxu0 0.0
    %863 = vmatmul.mubr.f32.gmra.mxu0 %v791
    %v864 = vpop.f32.mrf.mxu0
    %v865 = vadd.f32 %v786, %v864
    %v866 = vpop.f32.mrf.mxu0
    %867 = vdwg.mxu0
    %v868 = vmax.f32 %v860, 0.0
    %v869 = vmax.f32 %v865, 0.0
    %v870 = vld [vmem:[%s2 + $0xa0] sm:$0xff]
    %v871 = vld [vmem:[%s2 + $0xa8] sm:$0xff]
    %v872 = vld [vmem:[%s2 + $0xb0] sm:$0xff]
    %v873 = vld [vmem:[%s2 + $0xb8] sm:$0xff]
    %v874 = vld [vmem:[%s2 + $0xc0] sm:$0xff]
    %v875 = vld [vmem:[%s2 + $0xc8] sm:$0xff]
    %v876 = vld [vmem:[%s2 + $0xd0] sm:$0xff]
    %v877 = vld [vmem:[%s2 + $0xd8] sm:$0xff]
    %v878 = vld [vmem:[%s2 + $0x1b8] sm:$0x1]
    %v879 = vlaneseq
    %v880 = vshrl.u32 %v879, 7
    %v881 = vsub.s32 0, %v880
    %v882 = vrot.slane %v878, %v881
    %v884 = vsel %vm459, %v868, 0
    %v887 = vsel %vm459, %v869, 0
    %889 = vmatprep.subr.mxu0 0.0
    %890 = vmatpush1.msra.mxu0 0.0
    %891 = vmatprep.subr.mxu0 0.0
    %892 = vmatpush1.msra.mxu0 0.0
    %893 = vmatprep.subr.mxu0 0.0
    %894 = vmatpush1.msra.mxu0 0.0
    %895 = vmatprep.subr.mxu0 0.0
    %896 = vmatpush1.msra.mxu0 0.0
    %897 = vmatprep.subr.mxu0 0.0
    %898 = vmatpush1.msra.mxu0 0.0
    %899 = vmatprep.subr.mxu0 0.0
    %900 = vmatpush1.msra.mxu0 0.0
    %901 = vmatprep.subr.mxu0 0.0
    %902 = vmatpush1.msra.mxu0 0.0
    %903 = vmatprep.subr.mxu0 0.0
    %904 = vmatpush1.msra.mxu0 0.0
    %905 = vmatprep.subr.mxu0 0.0
    %906 = vmatpush1.msra.mxu0 %v877
    %907 = vmatprep.subr.mxu0 0.0
    %908 = vmatpush1.msra.mxu0 %v876
    %909 = vmatprep.subr.mxu0 0.0
    %910 = vmatpush1.msra.mxu0 %v875
    %911 = vmatprep.subr.mxu0 0.0
    %912 = vmatpush1.msra.mxu0 %v874
    %913 = vmatprep.subr.mxu0 0.0
    %914 = vmatpush1.msra.mxu0 %v873
    %915 = vmatprep.subr.mxu0 0.0
    %916 = vmatpush1.msra.mxu0 %v872
    %917 = vmatprep.subr.mxu0 0.0
    %918 = vmatpush1.msra.mxu0 %v871
    %919 = vmatprep.subr.mxu0 0.0
    %920 = vmatpush1.msra.mxu0 %v870
    %921 = vmatprep.subr.mxu0 0.0
    %922 = vmatpush2.msra.mxu0 0.0
    %923 = vmatprep.subr.mxu0 0.0
    %924 = vmatpush2.msra.mxu0 0.0
    %925 = vmatprep.subr.mxu0 0.0
    %926 = vmatpush2.msra.mxu0 0.0
    %927 = vmatprep.subr.mxu0 0.0
    %928 = vmatpush2.msra.mxu0 0.0
    %929 = vmatprep.subr.mxu0 0.0
    %930 = vmatpush2.msra.mxu0 0.0
    %931 = vmatprep.subr.mxu0 0.0
    %932 = vmatpush2.msra.mxu0 0.0
    %933 = vmatprep.subr.mxu0 0.0
    %934 = vmatpush2.msra.mxu0 0.0
    %935 = vmatprep.subr.mxu0 0.0
    %936 = vmatpush2.msra.mxu0 0.0
    %937 = vmatprep.subr.mxu0 0.0
    %938 = vmatpush2.msra.mxu0 0.0
    %939 = vmatprep.subr.mxu0 0.0
    %940 = vmatpush2.msra.mxu0 0.0
    %941 = vmatprep.subr.mxu0 0.0
    %942 = vmatpush2.msra.mxu0 0.0
    %943 = vmatprep.subr.mxu0 0.0
    %944 = vmatpush2.msra.mxu0 0.0
    %945 = vmatprep.subr.mxu0 0.0
    %946 = vmatpush2.msra.mxu0 0.0
    %947 = vmatprep.subr.mxu0 0.0
    %948 = vmatpush2.msra.mxu0 0.0
    %949 = vmatprep.subr.mxu0 0.0
    %950 = vmatpush2.msra.mxu0 0.0
    %951 = vmatprep.subr.mxu0 0.0
    %952 = vmatpush2.msra.mxu0 0.0
    %953 = vmatprep.mubr.f32.mxu0 0.0
    %954 = vmatmul.mubr.f32.gmra.mxu0 %v884
    %v955 = vpop.f32.mrf.mxu0
    %v956 = vadd.f32 %v882, %v955
    %v957 = vpop.f32.mrf.mxu0
    %958 = vmatprep.mubr.f32.mxu0 0.0
    %959 = vmatmul.mubr.f32.gmra.mxu0 %v887
    %v960 = vpop.f32.mrf.mxu0
    %v961 = vadd.f32 %v882, %v960
    %v962 = vpop.f32.mrf.mxu0
    %963 = vdwg.mxu0
    %v964 = vadd.f32 %v736, %v956
    %v965 = vadd.f32 %v737, %v961
    %966 = vst.msk [vmem:[#allocation2] sm:$0xff] %vm32, %v964
    %967 = vst.msk [vmem:[#allocation2 + $0x8] sm:$0xff] %vm32, %v965
    // Predicated region
    $region14: #{tpu_custom_call.1} parent=1 // pred_check
      _
    $region15: #{tpu_custom_call.1} parent=1 // pred_check_branch
      %969 = sbr.rel (0) target = $region17
    $region16: #{tpu_custom_call.1} parent=1 // pred_region
      %s971 = ssub.s32 256, 256
      %972 = vsyncadd [#allocation3], %s971
      %s973 = sshll.u32 [#allocation2], 4
      %s974 = int_to_ptr.vmem [resolvable:$true] %s973
      %979 = dma.vmem_to_hbm [thread:$0]  %s974, 256, %s3, [#allocation3], 128, 128, 8
    $region17: #{tpu_custom_call.1} parent=1 // pred_fallthru
      _
    // Predicated region
    $region18: #{tpu_custom_call.1} parent=1 // pred_check
      _
    $region19: #{tpu_custom_call.1} parent=1 // pred_check_branch
      %981 = sbr.rel (0) target = $region21
    $region20: #{tpu_custom_call.1} parent=1 // pred_region
      %982 = dma.done [#allocation3], 256
    $region21: #{tpu_custom_call.1} parent=1 // pred_fallthru
      _
    %983 = vsyncpa [#allocation3], 1

</llo_original>
